<compile_context>
chip_gen: v5e
topology: v5e:2x2
jax: 0.10.0
libtpu: 0.0.40
codegen_flags: <defaults>
</compile_context>

<pallas_src>
import functools
import math

import jax
import jax.numpy as jnp
from jax.experimental import pallas as pl
from jax.experimental.pallas import tpu as pltpu


def _attn_kernel(x_ref, attn_ref, *, scale):
    # x_ref: (RB, C, TN) tile of X.
    # attn_ref: (RB, C, C) f32 output block, resident across the n-tile grid
    # axis (same output block index for every n step) -> used as accumulator.
    k = pl.program_id(1)

    @pl.when(k == 0)
    def _():
        attn_ref[...] = jnp.zeros_like(attn_ref)

    xt = x_ref[...]
    # Raw Gram accumulation; shared-last-axis contraction, no materialized
    # transpose. Operands stay in the input dtype (energy precision matters
    # for the softmax); accumulation is f32.
    attn_ref[...] += jnp.einsum("rcn,rdn->rcd", xt, xt,
                                preferred_element_type=jnp.float32)

    @pl.when(k == pl.num_programs(1) - 1)
    def _():
        energy = attn_ref[...] * jnp.float32(scale)
        # softmax(max(energy) - energy) == exp(min(energy) - energy) / sum(...)
        # (single cross-lane reduce instead of two).
        e = jnp.exp(jnp.min(energy, axis=-1, keepdims=True) - energy)
        denom = jnp.sum(e, axis=-1, keepdims=True)
        attn_ref[...] = e * pl.reciprocal(denom, approx=True)


def _out_kernel(attn_ref, x_ref, gamma_ref, o_ref):
    # attn_ref: (RB, C, C) f32, resident across n tiles (constant block index).
    # x_ref / o_ref: (RB, C, TN), lane-dense.
    xt = x_ref[...]
    # bf16 MXU operands, f32 accumulation (attn @ X is robust in bf16).
    out = jnp.einsum("rcd,rdn->rcn",
                     attn_ref[...].astype(jnp.bfloat16),
                     xt.astype(jnp.bfloat16),
                     preferred_element_type=jnp.float32)
    gamma = gamma_ref[0]                                   # SMEM scalar read
    # Residual add re-reads the x tile (load slots have slack; no resident
    # f32 copy of the block is kept).
    o_ref[...] = (gamma * out + xt.astype(jnp.float32)).astype(o_ref.dtype)


def _vmem_limit_bytes():
    cap = 128 * 1024 * 1024
    try:
        cap = int(pltpu.get_tpu_info().vmem_capacity_bytes)
    except Exception:
        pass
    # ~96 MiB scoped on 128 MiB parts (v5e/v6e), ~48 MiB on v7x (64 MiB).
    return min((cap * 3) // 4, 96 * 1024 * 1024)


def _pick_tiles(b, c, n, itemsize, vmem_limit):
    """Returns (rb, tn): images per block and H*W tile size.

    Budget accounts for double-buffered input + output blocks, the f32/bf16
    temps and the small resident (C, C) attention block (~6-8x one block),
    hence the /8 on the scoped limit.
    """
    budget = max(vmem_limit // 8, 128 * 1024)

    img_bytes = c * n * itemsize
    if img_bytes <= budget:
        # Whole images fit: grow images-per-block to the budget (no grid>=2
        # constraint -- bigger blocks win on single-TC chips).
        rb = 1
        for cand in range(2, b + 1):
            if b % cand:
                continue
            if cand * img_bytes > budget:
                break
            rb = cand
        return rb, n

    # Otherwise tile the H*W (lane) axis in multiples of 128 that divide N.
    if n % 128 != 0:
        return 1, n  # must use the full axis; rely on the raised vmem limit
    tn = 128
    for d in range(128, n + 1, 128):
        if n % d:
            continue
        if c * d * itemsize > budget:
            break
        tn = d
    return 1, tn


def cam_module(x_nchw, gamma, *, images_per_block=None, n_tile=None):
    """Channel-attention forward (CAM_Module).

    x_nchw: (B, C, H, W); gamma: (1,) learnable scalar."""
    b, c, h, w = x_nchw.shape
    n = h * w
    scale = 1.0 / math.sqrt(float(n))

    # NCHW -> (B, C, H*W): pure reshape, no transpose / extra HBM traffic;
    # the lane axis is H*W so loads/stores are lane-dense.
    x_rows = x_nchw.reshape(b, c, n)

    vmem_limit = _vmem_limit_bytes()
    rb, tn = _pick_tiles(b, c, n, x_nchw.dtype.itemsize, vmem_limit)
    if images_per_block is not None:
        rb = images_per_block
    if n_tile is not None:
        tn = n_tile
    assert b % rb == 0, "images_per_block must divide the batch size"
    assert n % tn == 0, "n_tile must divide H*W"

    batch_blocks = b // rb
    n_tiles = n // tn

    # ---- Pass 1: per-image channel attention (B, C, C), f32. ----
    attn = pl.pallas_call(
        functools.partial(_attn_kernel, scale=scale),
        out_shape=jax.ShapeDtypeStruct((b, c, c), jnp.float32),
        grid_spec=pltpu.PrefetchScalarGridSpec(
            num_scalar_prefetch=0,
            grid=(batch_blocks, n_tiles),
            in_specs=[pl.BlockSpec((rb, c, tn), lambda i, k: (i, 0, k))],
            out_specs=pl.BlockSpec((rb, c, c), lambda i, k: (i, 0, 0)),
        ),
        compiler_params=pltpu.CompilerParams(
            dimension_semantics=("parallel", "arbitrary"),
            vmem_limit_bytes=vmem_limit,
        ),
    )(x_rows)

    # ---- Pass 2: out = gamma * (attn @ X) + X, streamed tile by tile. ----
    # TODO(synk): on v7x, split the batch / n-tile axis across the two
    # TensorCores explicitly (CORE_PARALLEL or pl.core_map) rather than
    # relying on "parallel" dimension semantics.
    out_rows = pl.pallas_call(
        _out_kernel,
        out_shape=jax.ShapeDtypeStruct((b, c, n), x_nchw.dtype),
        grid_spec=pltpu.PrefetchScalarGridSpec(
            num_scalar_prefetch=0,
            grid=(batch_blocks, n_tiles),
            in_specs=[
                pl.BlockSpec((rb, c, c), lambda i, k: (i, 0, 0)),      # attention
                pl.BlockSpec((rb, c, tn), lambda i, k: (i, 0, k)),     # x tile
                pl.BlockSpec(memory_space=pltpu.MemorySpace.SMEM),     # gamma
            ],
            out_specs=pl.BlockSpec((rb, c, tn), lambda i, k: (i, 0, k)),
        ),
        compiler_params=pltpu.CompilerParams(
            dimension_semantics=("parallel", "parallel"),
            vmem_limit_bytes=vmem_limit,
        ),
    )(attn, x_rows, gamma)

    return out_rows.reshape(b, c, h, w)


def cam_module_ref(x_nchw, gamma):
    """Pure-JAX f32 reference mirroring the PyTorch CAM_Module.forward."""
    b, c, h, w = x_nchw.shape
    scale = 1.0 / math.sqrt(h * w)
    xr = x_nchw.reshape(b, c, h * w).astype(jnp.float32)
    q = xr * math.sqrt(scale)
    energy = jnp.einsum("bcn,bdn->bcd", q, q)
    e_new = jnp.max(energy, axis=-1, keepdims=True) - energy
    attn = jax.nn.softmax(e_new, axis=-1)
    out = jnp.einsum("bcd,bdn->bcn", attn, xr)
    out = gamma[0] * out + xr
    return out.reshape(b, c, h, w).astype(x_nchw.dtype)


if __name__ == "__main__":
    B, C, H, W = 2, 4, 16, 16   # in_dim = 4

    key = jax.random.PRNGKey(0)
    x = jax.random.normal(key, (B, C, H, W), dtype=jnp.float32)

    # nn.Parameter(torch.zeros(1)) in the module; use a nonzero deterministic
    # value here so the attention path is actually exercised by the check.
    gamma = jnp.full((1,), 0.5, dtype=jnp.float32)

    out = jax.block_until_ready(cam_module(x, gamma))

    ref = cam_module_ref(x, gamma)
    assert out.shape == (B, C, H, W)
    # attn @ X uses bf16 MXU operands (f32 accumulation) and the softmax
    # denominator uses the approximate EUP reciprocal, so compare with a
    # bf16-level tolerance; the energy matmul itself stays in f32.
    assert jnp.allclose(out, ref, rtol=1e-2, atol=1e-2), "mismatch vs reference"

    print("KERNEL_OK")
</pallas_src>

<mosaic_0001>
module attributes {stable_mosaic.version = 11 : i64} {
  func.func @_attn_kernel(%arg0: i32, %arg1: i32, %arg2: memref<2x4x256xf32, #tpu.memory_space<vmem>>, %arg3: memref<2x4x4xf32, #tpu.memory_space<vmem>>) attributes {dimension_semantics = [#tpu.dimension_semantics<parallel>, #tpu.dimension_semantics<arbitrary>], iteration_bounds = array<i64: 1, 1>, scalar_prefetch = 0 : i64, scratch_operands = 0 : i64, tpu.core_type = #tpu.core_type<tc>, window_params = [{transform_indices = @transform_0, window_bounds = array<i64: 2, 4, 256>}, {transform_indices = @transform_1, window_bounds = array<i64: 2, 4, 4>}]} {
    %c0_i32 = arith.constant 0 : i32
    %0 = arith.cmpi eq, %arg1, %c0_i32 : i32
    %1 = arith.extui %0 : i1 to i32
    %c0_i32_0 = arith.constant 0 : i32
    %2 = arith.cmpi ne, %1, %c0_i32_0 : i32
    scf.if %2 {
      %cst_11 = arith.constant 0.000000e+00 : f32
      %11 = vector.broadcast %cst_11 : f32 to vector<2x4x4xf32>
      %c0_12 = arith.constant 0 : index
      %c0_13 = arith.constant 0 : index
      %c0_14 = arith.constant 0 : index
      %12 = vector.load %arg3[%c0_12, %c0_13, %c0_14] : memref<2x4x4xf32, #tpu.memory_space<vmem>>, vector<2x4x4xf32>
      tpu.vector_store %arg3[%c0_12, %c0_13, %c0_14], %11 {strides = array<i32>} : memref<2x4x4xf32, #tpu.memory_space<vmem>>, vector<2x4x4xf32>,
    } else {
    }
    %c0 = arith.constant 0 : index
    %c0_1 = arith.constant 0 : index
    %c0_2 = arith.constant 0 : index
    %3 = vector.load %arg2[%c0, %c0_1, %c0_2] : memref<2x4x256xf32, #tpu.memory_space<vmem>>, vector<2x4x256xf32>
    %c0_3 = arith.constant 0 : index
    %c0_4 = arith.constant 0 : index
    %c0_5 = arith.constant 0 : index
    %4 = vector.load %arg3[%c0_3, %c0_4, %c0_5] : memref<2x4x4xf32, #tpu.memory_space<vmem>>, vector<2x4x4xf32>
    "tpu.trace_start"() <{level = 10 : i32, message = "rcn,rdn->rcd"}> : () -> ()
    %cst = arith.constant dense<0.000000e+00> : vector<2x4x4xf32>
    %5 = tpu.matmul %3, %3, %cst {dimension_numbers = #tpu.dot_dimension_numbers<[2], [2], [1], [1], [0, 0, 0, 1, 1, 1], [0], [0]>} : vector<2x4x256xf32>, vector<2x4x256xf32>, vector<2x4x4xf32> -> vector<2x4x4xf32>
    "tpu.trace_stop"() : () -> ()
    %6 = arith.addf %4, %5 : vector<2x4x4xf32>
    %c0_6 = arith.constant 0 : index
    %c0_7 = arith.constant 0 : index
    %c0_8 = arith.constant 0 : index
    %7 = vector.load %arg3[%c0_6, %c0_7, %c0_8] : memref<2x4x4xf32, #tpu.memory_space<vmem>>, vector<2x4x4xf32>
    tpu.vector_store %arg3[%c0_6, %c0_7, %c0_8], %6 {strides = array<i32>} : memref<2x4x4xf32, #tpu.memory_space<vmem>>, vector<2x4x4xf32>,
    %c0_i32_9 = arith.constant 0 : i32
    %8 = arith.cmpi eq, %arg1, %c0_i32_9 : i32
    %9 = arith.extui %8 : i1 to i32
    %c0_i32_10 = arith.constant 0 : i32
    %10 = arith.cmpi ne, %9, %c0_i32_10 : i32
    scf.if %10 {
      %c0_11 = arith.constant 0 : index
      %c0_12 = arith.constant 0 : index
      %c0_13 = arith.constant 0 : index
      %11 = vector.load %arg3[%c0_11, %c0_12, %c0_13] : memref<2x4x4xf32, #tpu.memory_space<vmem>>, vector<2x4x4xf32>
      %cst_14 = arith.constant 6.250000e-02 : f32
      %12 = vector.broadcast %cst_14 : f32 to vector<2x4x4xf32>
      %13 = arith.mulf %11, %12 : vector<2x4x4xf32>
      %cst_15 = arith.constant dense<0x7F800000> : vector<2x4xf32>
      %14 = vector.multi_reduction <minimumf>, %13, %cst_15 [2] : vector<2x4x4xf32> to vector<2x4xf32>
      %15 = vector.shape_cast %14 : vector<2x4xf32> to vector<2x4x1xf32>
      %16 = vector.broadcast %15 : vector<2x4x1xf32> to vector<2x4x4xf32>
      %17 = arith.subf %16, %13 : vector<2x4x4xf32>
      %18 = math.exp %17 : vector<2x4x4xf32>
      %cst_16 = arith.constant dense<0.000000e+00> : vector<2x4xf32>
      %19 = vector.multi_reduction <add>, %18, %cst_16 [2] : vector<2x4x4xf32> to vector<2x4xf32>
      %20 = vector.shape_cast %19 : vector<2x4xf32> to vector<2x4x1xf32>
      %21 = tpu.reciprocal %20 {approx = true} : vector<2x4x1xf32> -> vector<2x4x1xf32>
      %22 = vector.broadcast %21 : vector<2x4x1xf32> to vector<2x4x4xf32>
      %23 = arith.mulf %18, %22 : vector<2x4x4xf32>
      %c0_17 = arith.constant 0 : index
      %c0_18 = arith.constant 0 : index
      %c0_19 = arith.constant 0 : index
      %24 = vector.load %arg3[%c0_17, %c0_18, %c0_19] : memref<2x4x4xf32, #tpu.memory_space<vmem>>, vector<2x4x4xf32>
      tpu.vector_store %arg3[%c0_17, %c0_18, %c0_19], %23 {strides = array<i32>} : memref<2x4x4xf32, #tpu.memory_space<vmem>>, vector<2x4x4xf32>,
    } else {
    }
    return
  }
  func.func @transform_0(%arg0: i32, %arg1: i32) -> (i32, i32, i32) {
    %c0_i32 = arith.constant 0 : i32
    %c0_i32_0 = arith.constant 0 : i32
    return %arg0, %c0_i32, %arg1 : i32, i32, i32
  }
  func.func @transform_1(%arg0: i32, %arg1: i32) -> (i32, i32, i32) {
    %c0_i32 = arith.constant 0 : i32
    %c0_i32_0 = arith.constant 0 : i32
    %c0_i32_1 = arith.constant 0 : i32
    return %arg0, %c0_i32, %c0_i32_0 : i32, i32, i32
  }
}

</mosaic_0001>

<llo_original>
// kernel: tpu_custom_call.1
$region0: #{tpu_custom_call.1}
  #allocation0 [shape = 'u32[]', space=smem, size = 0x4, offset = 0x4, fixed_abs, tag = 'smem constant byte address 0x4 - core index']
  #allocation1 [shape = 'u32[72,128]{1,0:T(1,128)}', space=vmem, size = 0x9000, scoped, tag = 'internal scratch']
  %s0 = inlined_call_operand.hbm [shape: f32[2,4,256], index: 0, kind: input, shape index: {}]
  %s1 = inlined_call_operand.hbm [shape: f32[2,4,4], index: 1, kind: output, shape index: {}]
  %s2 = sld [smem:[#allocation0]]
  $region26: #{tpu_custom_call.1} parent=0
    _
  %s4 = ssub.s32 1, %s2
  %s5 = scalar_select 0, %s4, %s2
  $region1: #{tpu_custom_call.1} parent=0
    #allocation2 [shape = 'u8[8192]{0}', space=vmem, size = 0x2000, scoped, tag = 'input window, operand 0, single buffered']
    #allocation3 [shape = 's32[1]{0}', space=sflag, size = 0x4, scoped, tag = 'scoped memory for tpu_custom_call.1']
    #allocation4 [shape = 's32[1]{0}', space=sflag, size = 0x4, scoped, tag = 'scoped memory for tpu_custom_call.1']
    #allocation5 [shape = 'u8[4096]{0}', space=vmem, size = 0x1000, scoped, tag = 'output window, operand 0, single buffered']
    %6 = vsyncpa [#allocation3], 0
    %7 = vsyncpa [#allocation4], 0
    // Predicated region
    $region2: #{tpu_custom_call.1} parent=1 // pred_check
      _
    $region3: #{tpu_custom_call.1} parent=1 // pred_check_branch
      %9 = sbr.rel (0) target = $region5
    $region4: #{tpu_custom_call.1} parent=1 // pred_region
      %11 = vsyncadd [#allocation3], 0
      %s12 = sshll.u32 %s0, 4
      %s13 = int_to_ptr.hbm [resolvable:$true] %s12
      %s14 = sshll.u32 [#allocation2], 4
      %s15 = int_to_ptr.vmem [resolvable:$true] %s14
      %20 = dma.hbm_to_vmem [thread:$0]  %s13, 256, %s15, [#allocation3], 128, 128, 8
    $region5: #{tpu_custom_call.1} parent=1 // pred_fallthru
      _
    // Predicated region
    $region6: #{tpu_custom_call.1} parent=1 // pred_check
      _
    $region7: #{tpu_custom_call.1} parent=1 // pred_check_branch
      %22 = sbr.rel (0) target = $region9
    $region8: #{tpu_custom_call.1} parent=1 // pred_region
      %24 = dma.done [#allocation3], 256
    $region9: #{tpu_custom_call.1} parent=1 // pred_fallthru
      _
    %p25 = scmp.eq.s32.totalorder 0, 0
    // Predicated region
    $region10: #{tpu_custom_call.1} parent=1 // pred_check
      %p26 = pneg %p25
    $region11: #{tpu_custom_call.1} parent=1 // pred_check_branch
      %28 = sbr.rel (%p26) target = $region13
    $region12: #{tpu_custom_call.1} parent=1 // pred_region
      %vm29 = vcmask 27648
      %30 = vst.msk [vmem:[#allocation5] sm:$0xf] %vm29, 0.0
      %31 = vst.msk [vmem:[#allocation5 + $0x4] sm:$0xf] %vm29, 0.0
    $region13: #{tpu_custom_call.1} parent=1 // pred_fallthru
      _
    %v32 = vld [vmem:[#allocation2] sm:$0xff]
    %v33 = vld [vmem:[#allocation2 + $0x8] sm:$0xff]
    %v34 = vld [vmem:[#allocation5] sm:$0xf]
    %v35 = vld [vmem:[#allocation5 + $0x4] sm:$0xf]
    %37 = vst [vmem:[#allocation1] ss:$2 sm:$0xff] %v32
    %v38 = vld.sshfl [vmem:[#allocation1] sm:$0xff pattern:$0x75316420]
    %v39 = vld.sshfl [vmem:[#allocation1 + $0x8] sm:$0xff pattern:$0x75316420]
    %42 = vst [vmem:[#allocation1] ss:$2 sm:$0xff] %v32
    %v43 = vld.sshfl [vmem:[#allocation1] sm:$0xff pattern:$0x75316420]
    %v44 = vld.sshfl [vmem:[#allocation1 + $0x8] sm:$0xff pattern:$0x75316420]
    %47 = vmatpush.xpose.msra.mxu0 0.0
    %48 = vmatpush.xpose.msra.mxu0 0.0
    %49 = vmatpush.xpose.msra.mxu0 0.0
    %50 = vmatpush.xpose.msra.mxu0 0.0
    %51 = vmatpush.xpose.msra.mxu0 0.0
    %52 = vmatpush.xpose.msra.mxu0 0.0
    %53 = vmatpush.xpose.msra.mxu0 0.0
    %54 = vmatpush.xpose.msra.mxu0 0.0
    %55 = vmatpush.xpose.msra.mxu0 0.0
    %56 = vmatpush.xpose.msra.mxu0 0.0
    %57 = vmatpush.xpose.msra.mxu0 0.0
    %58 = vmatpush.xpose.msra.mxu0 0.0
    %59 = vmatpush.xpose.msra.mxu0 0.0
    %60 = vmatpush.xpose.msra.mxu0 0.0
    %61 = vmatpush.xpose.msra.mxu0 0.0
    %62 = vmatpush.xpose.msra.mxu0 %v43
    %63 = vmatmul.f32.gmra.mxu0 %v38
    %v64 = vpop.f32.mrf.mxu0
    %v65 = vadd.f32 0.0, %v64
    %66 = vdwg.mxu0
    %67 = vmatpush.xpose.msra.mxu0 0.0
    %68 = vmatpush.xpose.msra.mxu0 0.0
    %69 = vmatpush.xpose.msra.mxu0 0.0
    %70 = vmatpush.xpose.msra.mxu0 0.0
    %71 = vmatpush.xpose.msra.mxu0 0.0
    %72 = vmatpush.xpose.msra.mxu0 0.0
    %73 = vmatpush.xpose.msra.mxu0 0.0
    %74 = vmatpush.xpose.msra.mxu0 0.0
    %75 = vmatpush.xpose.msra.mxu0 0.0
    %76 = vmatpush.xpose.msra.mxu0 0.0
    %77 = vmatpush.xpose.msra.mxu0 0.0
    %78 = vmatpush.xpose.msra.mxu0 0.0
    %79 = vmatpush.xpose.msra.mxu0 0.0
    %80 = vmatpush.xpose.msra.mxu0 0.0
    %81 = vmatpush.xpose.msra.mxu0 0.0
    %82 = vmatpush.xpose.msra.mxu0 %v44
    %83 = vmatmul.f32.gmra.mxu0 %v39
    %v84 = vpop.f32.mrf.mxu0
    %v85 = vadd.f32 %v65, %v84
    %86 = vdwg.mxu0
    %88 = vst [vmem:[#allocation1] ss:$2 sm:$0xff] %v33
    %v89 = vld.sshfl [vmem:[#allocation1] sm:$0xff pattern:$0x75316420]
    %v90 = vld.sshfl [vmem:[#allocation1 + $0x8] sm:$0xff pattern:$0x75316420]
    %93 = vst [vmem:[#allocation1] ss:$2 sm:$0xff] %v33
    %v94 = vld.sshfl [vmem:[#allocation1] sm:$0xff pattern:$0x75316420]
    %v95 = vld.sshfl [vmem:[#allocation1 + $0x8] sm:$0xff pattern:$0x75316420]
    %98 = vmatpush.xpose.msra.mxu0 0.0
    %99 = vmatpush.xpose.msra.mxu0 0.0
    %100 = vmatpush.xpose.msra.mxu0 0.0
    %101 = vmatpush.xpose.msra.mxu0 0.0
    %102 = vmatpush.xpose.msra.mxu0 0.0
    %103 = vmatpush.xpose.msra.mxu0 0.0
    %104 = vmatpush.xpose.msra.mxu0 0.0
    %105 = vmatpush.xpose.msra.mxu0 0.0
    %106 = vmatpush.xpose.msra.mxu0 0.0
    %107 = vmatpush.xpose.msra.mxu0 0.0
    %108 = vmatpush.xpose.msra.mxu0 0.0
    %109 = vmatpush.xpose.msra.mxu0 0.0
    %110 = vmatpush.xpose.msra.mxu0 0.0
    %111 = vmatpush.xpose.msra.mxu0 0.0
    %112 = vmatpush.xpose.msra.mxu0 0.0
    %113 = vmatpush.xpose.msra.mxu0 %v94
    %114 = vmatmul.f32.gmra.mxu0 %v89
    %v115 = vpop.f32.mrf.mxu0
    %v116 = vadd.f32 0.0, %v115
    %117 = vdwg.mxu0
    %118 = vmatpush.xpose.msra.mxu0 0.0
    %119 = vmatpush.xpose.msra.mxu0 0.0
    %120 = vmatpush.xpose.msra.mxu0 0.0
    %121 = vmatpush.xpose.msra.mxu0 0.0
    %122 = vmatpush.xpose.msra.mxu0 0.0
    %123 = vmatpush.xpose.msra.mxu0 0.0
    %124 = vmatpush.xpose.msra.mxu0 0.0
    %125 = vmatpush.xpose.msra.mxu0 0.0
    %126 = vmatpush.xpose.msra.mxu0 0.0
    %127 = vmatpush.xpose.msra.mxu0 0.0
    %128 = vmatpush.xpose.msra.mxu0 0.0
    %129 = vmatpush.xpose.msra.mxu0 0.0
    %130 = vmatpush.xpose.msra.mxu0 0.0
    %131 = vmatpush.xpose.msra.mxu0 0.0
    %132 = vmatpush.xpose.msra.mxu0 0.0
    %133 = vmatpush.xpose.msra.mxu0 %v95
    %134 = vmatmul.f32.gmra.mxu0 %v90
    %v135 = vpop.f32.mrf.mxu0
    %v136 = vadd.f32 %v116, %v135
    %137 = vdwg.mxu0
    %v138 = vadd.f32 %v34, %v85
    %v139 = vadd.f32 %v35, %v136
    %vm140 = vcmask 27648
    %141 = vst.msk [vmem:[#allocation5] sm:$0xf] %vm140, %v138
    %142 = vst.msk [vmem:[#allocation5 + $0x4] sm:$0xf] %vm140, %v139
    // Predicated region
    $region14: #{tpu_custom_call.1} parent=1 // pred_check
      %p143 = pneg %p25
    $region15: #{tpu_custom_call.1} parent=1 // pred_check_branch
      %145 = sbr.rel (%p143) target = $region17
    $region16: #{tpu_custom_call.1} parent=1 // pred_region
      %v146 = vld [vmem:[#allocation5] sm:$0xf]
      %v147 = vld [vmem:[#allocation5 + $0x4] sm:$0xf]
      %v148 = vmul.f32 %v146, 0.0625
      %v149 = vmul.f32 %v147, 0.0625
      %v150 = vsel %vm140, %v148, inf
      %151 = vmin.xlane.f32.xlu0 %v150
      %v152 = vpop.xlane.xlu0 %151
      %v153 = vsel %vm140, %v149, inf
      %154 = vmin.xlane.f32.xlu0 %v153
      %v155 = vpop.xlane.xlu0 %154
      %v156 = vsub.f32 %v152, %v148
      %v157 = vsub.f32 %v155, %v149
      %v158 = vmul.f32 %v156, 1.442695
      %v159 = vpow.pop %v158
      %v160 = vmul.f32 %v157, 1.442695
      %v161 = vpow.pop %v160
      %v162 = vsel %vm140, %v159, 0.0
      %163 = vadd.xlane.f32.xlu0 %v162
      %v164 = vpop.xlane.xlu0 %163
      %v165 = vsel %vm140, %v161, 0.0
      %166 = vadd.xlane.f32.xlu0 %v165
      %v167 = vpop.xlane.xlu0 %166
      %v168 = vrcp.pop %v164
      %v169 = vrcp.pop %v167
      %v170 = vmul.f32 %v159, %v168
      %v171 = vmul.f32 %v161, %v169
      %172 = vst.msk [vmem:[#allocation5] sm:$0xf] %vm140, %v170
      %173 = vst.msk [vmem:[#allocation5 + $0x4] sm:$0xf] %vm140, %v171
    $region17: #{tpu_custom_call.1} parent=1 // pred_fallthru
      _
    // Predicated region
    $region18: #{tpu_custom_call.1} parent=1 // pred_check
      _
    $region19: #{tpu_custom_call.1} parent=1 // pred_check_branch
      %175 = sbr.rel (0) target = $region21
    $region20: #{tpu_custom_call.1} parent=1 // pred_region
      %177 = vsyncadd [#allocation4], 0
      %s178 = sshll.u32 [#allocation5], 4
      %s179 = int_to_ptr.vmem [resolvable:$true] %s178
      %s180 = sshll.u32 %s1, 4
      %s181 = int_to_ptr.hbm [resolvable:$true] %s180
      %186 = dma.vmem_to_hbm [thread:$0]  %s179, 128, %s181, [#allocation4], 64, 64, 4
    $region21: #{tpu_custom_call.1} parent=1 // pred_fallthru
      _
    // Predicated region
    $region22: #{tpu_custom_call.1} parent=1 // pred_check
      _
    $region23: #{tpu_custom_call.1} parent=1 // pred_check_branch
      %188 = sbr.rel (0) target = $region25
    $region24: #{tpu_custom_call.1} parent=1 // pred_region
      %190 = dma.done [#allocation4], 128
    $region25: #{tpu_custom_call.1} parent=1 // pred_fallthru
      _
    %191 = vsyncpa [#allocation3], 1
    %192 = vsyncpa [#allocation4], 1

</llo_original>
